<compile_context>
chip_gen: v7x
topology: tpu7x:2x2x1
jax: 0.10.0
libtpu: 0.0.40
codegen_flags: <defaults>
</compile_context>

<pallas_src>
import math

import numpy as np
import jax
import jax.numpy as jnp
from jax.experimental import pallas as pl
from jax.experimental.pallas import tpu as pltpu


# ----------------------------------------------------------------------------
# torchaudio-equivalent Resample(orig_freq, new_freq) as a dense matrix R, so
# that   resampled = waveform @ R.T.  Built once on the host in float64.
# Follows torchaudio._get_sinc_resample_kernel / _apply_sinc_resample_kernel
# with defaults: lowpass_filter_width=6, rolloff=0.99, sinc_interp_hann.
# ----------------------------------------------------------------------------
def make_resample_matrix(length, orig_freq=44000, new_freq=8000,
                         lowpass_filter_width=6, rolloff=0.99):
    g = math.gcd(int(orig_freq), int(new_freq))
    orig = int(orig_freq) // g
    new = int(new_freq) // g
    base_freq = min(orig, new) * rolloff
    width = int(math.ceil(lowpass_filter_width * orig / base_freq))

    idx = np.arange(-width, width + orig, dtype=np.float64) / orig          # (K,)
    t = np.arange(0, -new, -1, dtype=np.float64)[:, None] / new + idx[None]  # (new, K)
    t = np.clip(t * base_freq, -lowpass_filter_width, lowpass_filter_width)
    window = np.cos(t * math.pi / lowpass_filter_width / 2.0) ** 2
    tpi = t * math.pi
    scale = base_freq / orig
    kernel = np.where(tpi == 0.0, 1.0, np.sin(tpi) / np.where(tpi == 0.0, 1.0, tpi))
    kernel = kernel * window * scale                                          # (new, K)

    K = kernel.shape[1]                       # = 2*width + orig
    target_length = int(math.ceil(new * length / orig))
    num_positions = length // orig + 1        # conv1d positions with stride=orig

    R = np.zeros((target_length, length), dtype=np.float64)
    for p in range(num_positions):
        for c in range(new):
            o = p * new + c
            if o >= target_length:
                continue
            for k in range(K):
                j = p * orig - width + k      # index into the un-padded waveform
                if 0 <= j < length:
                    R[o, j] += kernel[c, k]
    return R                                   # float64 (target_length, length)


# ----------------------------------------------------------------------------
# Host-side parameter preparation: exact f64 fold + full lane padding (done once).
# ----------------------------------------------------------------------------
def prepare_fused_params(params, lane=128, sub=8):
    (we_t, be, wd_t, bd, r_t, wh_t, bh, wc_t, bc) = params
    T, H = we_t.shape
    HC, C = wc_t.shape

    def up(v, m):
        return ((v + m - 1) // m) * m

    T_pad, H_pad, HC_pad, C_pad = up(T, lane), up(H, lane), up(HC, lane), up(C, lane)

    # Exact fold of decoder -> resample -> classifier-hidden (no nonlinearity between them).
    wd64 = np.asarray(wd_t, np.float64)
    bd64 = np.asarray(bd, np.float64)
    rt64 = np.asarray(r_t, np.float64)
    wh64 = np.asarray(wh_t, np.float64)
    bh64 = np.asarray(bh, np.float64)
    w_fused = wd64 @ rt64 @ wh64              # (H, HC)
    b_fused = bd64 @ rt64 @ wh64 + bh64       # (1, HC)

    # Lane padding with zeros: exact because tanh(0)=0 and relu(0+0)=0, and padded
    # weight rows/cols + padded bias entries are all zero.
    we_pad = np.zeros((T_pad, H_pad), np.float32)
    we_pad[:T, :H] = np.asarray(we_t, np.float32)
    wf_pad = np.zeros((H_pad, HC_pad), np.float32)
    wf_pad[:H, :HC] = w_fused.astype(np.float32)
    wc_pad = np.zeros((HC_pad, C_pad), np.float32)
    wc_pad[:HC, :C] = np.asarray(wc_t, np.float32)

    # Stack the three biases into one sublane-padded array -> a single input ref / DMA.
    LB = max(H_pad, HC_pad, C_pad)
    biases = np.zeros((sub, LB), np.float32)
    biases[0, :H] = np.asarray(be, np.float32).reshape(-1)
    biases[1, :HC] = b_fused.astype(np.float32).reshape(-1)
    biases[2, :C] = np.asarray(bc, np.float32).reshape(-1)

    return dict(
        we=jnp.asarray(we_pad), wf=jnp.asarray(wf_pad), wc=jnp.asarray(wc_pad),
        biases=jnp.asarray(biases),
        T=T, T_pad=T_pad, H=H, H_pad=H_pad, HC=HC, HC_pad=HC_pad, C=C, C_pad=C_pad)


# ----------------------------------------------------------------------------
# Kernel factory.  Returns a jitted callable x -> logits.
# ----------------------------------------------------------------------------
def make_whole_system_fn(fused, max_batch_tile=256):
    T, T_pad = fused["T"], fused["T_pad"]
    H_pad, HC_pad = fused["H_pad"], fused["HC_pad"]
    C, C_pad = fused["C"], fused["C_pad"]
    n_bias_rows, LB = fused["biases"].shape

    def kernel(x_ref, we_ref, wf_ref, wc_ref, b_ref, out_ref):
        be = b_ref[0:1, :H_pad]      # static slices of the stacked-bias ref (zero cost)
        bf = b_ref[1:2, :HC_pad]
        bc = b_ref[2:3, :C_pad]
        # h = tanh(x @ We + be)                        (encoder)
        h = jnp.tanh(
            jnp.dot(x_ref[...], we_ref[...], preferred_element_type=jnp.float32) + be)
        # z = relu(h @ W_fused + b_fused)              (decoder -> resample -> hidden, folded)
        z = jnp.maximum(
            jnp.dot(h, wf_ref[...], preferred_element_type=jnp.float32) + bf, 0.0)
        # out = z @ Wc + bc                            (classifier output, lane-padded)
        out_ref[...] = (
            jnp.dot(z, wc_ref[...], preferred_element_type=jnp.float32) + bc)

    @jax.jit
    def run(x, we, wf, wc, biases):
        B = x.shape[0]
        B8 = ((B + 7) // 8) * 8                 # sublane-pad the batch
        bm = min(max_batch_tile, B8)            # batch tile: fills MXU rows at large B
        n_tiles = pl.cdiv(B8, bm)
        B_pad = n_tiles * bm

        x_pad = jnp.zeros((B_pad, T_pad), jnp.float32)
        x_pad = x_pad.at[:B, :T].set(x.astype(jnp.float32))

        flops = 2 * B_pad * (T_pad * H_pad + H_pad * HC_pad + HC_pad * C_pad)
        bytes_accessed = 4 * (x_pad.size + we.size + wf.size + wc.size
                              + biases.size + B_pad * C_pad)

        grid_spec = pltpu.PrefetchScalarGridSpec(
            num_scalar_prefetch=0,
            grid=(n_tiles,),
            in_specs=[
                # x tiles stream over the batch grid (auto double-buffered)
                pl.BlockSpec((bm, T_pad), lambda i: (i, 0)),
                # weights / stacked biases: constant index_map -> DMA'd once, stay resident
                pl.BlockSpec((T_pad, H_pad), lambda i: (0, 0)),
                pl.BlockSpec((H_pad, HC_pad), lambda i: (0, 0)),
                pl.BlockSpec((HC_pad, C_pad), lambda i: (0, 0)),
                pl.BlockSpec((n_bias_rows, LB), lambda i: (0, 0)),
            ],
            out_specs=pl.BlockSpec((bm, C_pad), lambda i: (i, 0)),
        )

        logits_pad = pl.pallas_call(
            kernel,
            out_shape=jax.ShapeDtypeStruct((B_pad, C_pad), jnp.float32),
            grid_spec=grid_spec,
            compiler_params=pltpu.CompilerParams(
                dimension_semantics=("parallel",)),   # shard batch tiles across v7x's 2 TCs
            cost_estimate=pl.CostEstimate(flops=flops,
                                          transcendentals=B_pad * H_pad,
                                          bytes_accessed=bytes_accessed),
        )(x_pad, we, wf, wc, biases)

        return logits_pad[:B, :C]

    def whole_system(x):
        return run(x, fused["we"], fused["wf"], fused["wc"], fused["biases"])

    return whole_system


# ----------------------------------------------------------------------------
# Pure-JAX reference: the ORIGINAL unfused chain (defense -> resample -> classifier).
# ----------------------------------------------------------------------------
def whole_system_ref(x, params):
    (we_t, be, wd_t, bd, r_t, wh_t, bh, wc_t, bc) = params
    h = jnp.tanh(x @ we_t + be)
    rec = h @ wd_t + bd
    res = rec @ r_t
    z = jnp.maximum(res @ wh_t + bh, 0.0)
    return z @ wc_t + bc


if __name__ == "__main__":
    # Small shapes consistent with the forward:
    #   batch=2 waveforms of length T=176 (@44kHz) -> resampled length 32 (@8kHz) -> 10 classes.
    B, T = 2, 176
    H = 64          # defense autoencoder bottleneck
    HC = 32         # classifier hidden width
    C = 10          # num classes
    ORIG_SR, NEW_SR = 44000, 8000

    R = make_resample_matrix(T, ORIG_SR, NEW_SR)      # (T_NEW, T) float64
    T_NEW = R.shape[0]                                # = 32
    r_t = jnp.asarray(R.T.astype(np.float32))         # (T, T_NEW)

    key = jax.random.PRNGKey(0)
    kx, k1, k2, k3, k4 = jax.random.split(key, 5)

    # Deterministic synthetic parameters (weights pre-transposed to (in, out)).
    we_t = jax.random.normal(k1, (T, H), jnp.float32) * 0.05
    be = jnp.zeros((1, H), jnp.float32)
    wd_t = jax.random.normal(k2, (H, T), jnp.float32) * 0.05
    bd = jnp.zeros((1, T), jnp.float32)
    wh_t = jax.random.normal(k3, (T_NEW, HC), jnp.float32) * 0.1
    bh = jnp.full((1, HC), 0.01, jnp.float32)
    wc_t = jax.random.normal(k4, (HC, C), jnp.float32) * 0.1
    bc = jnp.zeros((1, C), jnp.float32)
    params = (we_t, be, wd_t, bd, r_t, wh_t, bh, wc_t, bc)

    fused = prepare_fused_params(params)
    whole_system = make_whole_system_fn(fused)

    x = jax.random.normal(kx, (B, T), jnp.float32)

    out = jax.block_until_ready(whole_system(x))

    ref = jax.block_until_ready(whole_system_ref(x, params))
    assert out.shape == (B, C)
    np.testing.assert_allclose(np.asarray(out), np.asarray(ref), rtol=1e-4, atol=1e-4)

    print("KERNEL_OK")
</pallas_src>

<mosaic_0001>
module attributes {stable_mosaic.version = 11 : i64} {
  func.func @kernel(%arg0: i32, %arg1: memref<8x256xf32, #tpu.memory_space<vmem>>, %arg2: memref<256x128xf32, #tpu.memory_space<vmem>>, %arg3: memref<128x128xf32, #tpu.memory_space<vmem>>, %arg4: memref<128x128xf32, #tpu.memory_space<vmem>>, %arg5: memref<8x128xf32, #tpu.memory_space<vmem>>, %arg6: memref<8x128xf32, #tpu.memory_space<vmem>>) attributes {dimension_semantics = [#tpu.dimension_semantics<parallel>], iteration_bounds = array<i64: 1>, scalar_prefetch = 0 : i64, scratch_operands = 0 : i64, tpu.core_type = #tpu.core_type<tc>, window_params = [{transform_indices = @transform_0, window_bounds = array<i64: 8, 256>}, {pipeline_mode = #tpu.pipeline_mode<synchronous>, transform_indices = @transform_1, window_bounds = array<i64: 256, 128>}, {pipeline_mode = #tpu.pipeline_mode<synchronous>, transform_indices = @transform_2, window_bounds = array<i64: 128, 128>}, {pipeline_mode = #tpu.pipeline_mode<synchronous>, transform_indices = @transform_3, window_bounds = array<i64: 128, 128>}, {pipeline_mode = #tpu.pipeline_mode<synchronous>, transform_indices = @transform_4, window_bounds = array<i64: 8, 128>}, {transform_indices = @transform_5, window_bounds = array<i64: 8, 128>}]} {
    %c0 = arith.constant 0 : index
    %c0_0 = arith.constant 0 : index
    %0 = vector.load %arg5[%c0, %c0_0] : memref<8x128xf32, #tpu.memory_space<vmem>>, vector<1x128xf32>
    %c1 = arith.constant 1 : index
    %c0_1 = arith.constant 0 : index
    %1 = vector.load %arg5[%c1, %c0_1] : memref<8x128xf32, #tpu.memory_space<vmem>>, vector<1x128xf32>
    %c2 = arith.constant 2 : index
    %c0_2 = arith.constant 0 : index
    %2 = vector.load %arg5[%c2, %c0_2] : memref<8x128xf32, #tpu.memory_space<vmem>>, vector<1x128xf32>
    %c0_3 = arith.constant 0 : index
    %c0_4 = arith.constant 0 : index
    %3 = vector.load %arg1[%c0_3, %c0_4] : memref<8x256xf32, #tpu.memory_space<vmem>>, vector<8x256xf32>
    %c0_5 = arith.constant 0 : index
    %c0_6 = arith.constant 0 : index
    %4 = vector.load %arg2[%c0_5, %c0_6] : memref<256x128xf32, #tpu.memory_space<vmem>>, vector<256x128xf32>
    %cst = arith.constant dense<0.000000e+00> : vector<8x128xf32>
    %5 = tpu.matmul %3, %4, %cst {dimension_numbers = #tpu.dot_dimension_numbers<[1], [0], [0], [1], [0, 0, 1, 1], [], []>} : vector<8x256xf32>, vector<256x128xf32>, vector<8x128xf32> -> vector<8x128xf32>
    %6 = vector.broadcast %0 : vector<1x128xf32> to vector<8x128xf32>
    %7 = arith.addf %5, %6 : vector<8x128xf32>
    %8 = math.tanh %7 : vector<8x128xf32>
    %c0_7 = arith.constant 0 : index
    %c0_8 = arith.constant 0 : index
    %9 = vector.load %arg3[%c0_7, %c0_8] : memref<128x128xf32, #tpu.memory_space<vmem>>, vector<128x128xf32>
    %cst_9 = arith.constant dense<0.000000e+00> : vector<8x128xf32>
    %10 = tpu.matmul %8, %9, %cst_9 {dimension_numbers = #tpu.dot_dimension_numbers<[1], [0], [0], [1], [0, 0, 1, 1], [], []>} : vector<8x128xf32>, vector<128x128xf32>, vector<8x128xf32> -> vector<8x128xf32>
    %11 = vector.broadcast %1 : vector<1x128xf32> to vector<8x128xf32>
    %12 = arith.addf %10, %11 : vector<8x128xf32>
    %cst_10 = arith.constant 0.000000e+00 : f32
    %13 = vector.broadcast %cst_10 : f32 to vector<8x128xf32>
    %14 = arith.maximumf %12, %13 : vector<8x128xf32>
    %c0_11 = arith.constant 0 : index
    %c0_12 = arith.constant 0 : index
    %15 = vector.load %arg4[%c0_11, %c0_12] : memref<128x128xf32, #tpu.memory_space<vmem>>, vector<128x128xf32>
    %cst_13 = arith.constant dense<0.000000e+00> : vector<8x128xf32>
    %16 = tpu.matmul %14, %15, %cst_13 {dimension_numbers = #tpu.dot_dimension_numbers<[1], [0], [0], [1], [0, 0, 1, 1], [], []>} : vector<8x128xf32>, vector<128x128xf32>, vector<8x128xf32> -> vector<8x128xf32>
    %17 = vector.broadcast %2 : vector<1x128xf32> to vector<8x128xf32>
    %18 = arith.addf %16, %17 : vector<8x128xf32>
    %c0_14 = arith.constant 0 : index
    %c0_15 = arith.constant 0 : index
    %19 = vector.load %arg6[%c0_14, %c0_15] : memref<8x128xf32, #tpu.memory_space<vmem>>, vector<8x128xf32>
    tpu.vector_store %arg6[%c0_14, %c0_15], %18 {strides = array<i32>} : memref<8x128xf32, #tpu.memory_space<vmem>>, vector<8x128xf32>,
    return
  }
  func.func @transform_0(%arg0: i32) -> (i32, i32) {
    %c0_i32 = arith.constant 0 : i32
    %c0_i32_0 = arith.constant 0 : i32
    return %arg0, %c0_i32 : i32, i32
  }
  func.func @transform_1(%arg0: i32) -> (i32, i32) {
    %c0_i32 = arith.constant 0 : i32
    %c0_i32_0 = arith.constant 0 : i32
    %c0_i32_1 = arith.constant 0 : i32
    return %c0_i32, %c0_i32_0 : i32, i32
  }
  func.func @transform_2(%arg0: i32) -> (i32, i32) {
    %c0_i32 = arith.constant 0 : i32
    %c0_i32_0 = arith.constant 0 : i32
    %c0_i32_1 = arith.constant 0 : i32
    return %c0_i32, %c0_i32_0 : i32, i32
  }
  func.func @transform_3(%arg0: i32) -> (i32, i32) {
    %c0_i32 = arith.constant 0 : i32
    %c0_i32_0 = arith.constant 0 : i32
    %c0_i32_1 = arith.constant 0 : i32
    return %c0_i32, %c0_i32_0 : i32, i32
  }
  func.func @transform_4(%arg0: i32) -> (i32, i32) {
    %c0_i32 = arith.constant 0 : i32
    %c0_i32_0 = arith.constant 0 : i32
    %c0_i32_1 = arith.constant 0 : i32
    return %c0_i32, %c0_i32_0 : i32, i32
  }
  func.func @transform_5(%arg0: i32) -> (i32, i32) {
    %c0_i32 = arith.constant 0 : i32
    %c0_i32_0 = arith.constant 0 : i32
    return %arg0, %c0_i32 : i32, i32
  }
}

</mosaic_0001>

<llo_original>
// kernel: run.1
$region0: #{run.1}
  #allocation0 [shape = 'u32[]', space=smem, size = 0x4, offset = 0x4, fixed_abs, tag = 'smem constant byte address 0x4 - core index']
  #allocation1 [shape = 'u32[144,128]{1,0:T(1,128)}', space=vmem, size = 0x12000, scoped, tag = 'internal scratch']
  %s0 = inlined_call_operand.vmem [shape: f32[8,256], index: 0, kind: input, shape index: {}]
  %s1 = inlined_call_operand.hbm [shape: f32[256,128], index: 1, kind: input, shape index: {}]
  %s2 = inlined_call_operand.hbm [shape: f32[128,128], index: 2, kind: input, shape index: {}]
  %s3 = inlined_call_operand.hbm [shape: f32[128,128], index: 3, kind: input, shape index: {}]
  %s4 = inlined_call_operand.vmem [shape: f32[8,128], index: 4, kind: input, shape index: {}]
  %s5 = inlined_call_operand.vmem [shape: f32[8,128], index: 5, kind: output, shape index: {}]
  %s6 = sld [smem:[#allocation0]]
  $region42: #{run.1} parent=0
    _
  %s8 = ssub.s32 1, %s6
  %s9 = scalar_select 0, %s8, %s6
  $region1: #{run.1} parent=0
    #allocation2 [shape = 'u8[131072]{0}', space=vmem, size = 0x20000, scoped, tag = 'input window, operand 1, single buffered']
    #allocation3 [shape = 's32[1]{0}', space=sflag, size = 0x4, scoped, tag = 'scoped memory for run.1']
    #allocation4 [shape = 'u8[65536]{0}', space=vmem, size = 0x10000, scoped, tag = 'input window, operand 2, single buffered']
    #allocation5 [shape = 's32[1]{0}', space=sflag, size = 0x4, scoped, tag = 'scoped memory for run.1']
    #allocation6 [shape = 'u8[65536]{0}', space=vmem, size = 0x10000, scoped, tag = 'input window, operand 3, single buffered']
    %10 = vsyncpa [#allocation3], 0
    %11 = vsyncpa [#allocation5], 0
    // Predicated region
    $region2: #{run.1} parent=1 // pred_check
      _
    $region3: #{run.1} parent=1 // pred_check_branch
      %13 = sbr.rel (0) target = $region5
    $region4: #{run.1} parent=1 // pred_region
      _
    $region5: #{run.1} parent=1 // pred_fallthru
      _
    // Predicated region
    $region6: #{run.1} parent=1 // pred_check
      _
    $region7: #{run.1} parent=1 // pred_check_branch
      %15 = sbr.rel (0) target = $region9
    $region8: #{run.1} parent=1 // pred_region
      %s17 = ssub.s32 4096, 4096
      %18 = vsyncadd [#allocation3], %s17
      %s19 = sshll.u32 [#allocation2], 4
      %s20 = int_to_ptr.vmem [resolvable:$true] %s19
      %25 = dma.hbm_to_vmem [thread:$0]  %s1, 4096, %s20, [#allocation3], 128, 128, 8
    $region9: #{run.1} parent=1 // pred_fallthru
      _
    // Predicated region
    $region10: #{run.1} parent=1 // pred_check
      _
    $region11: #{run.1} parent=1 // pred_check_branch
      %27 = sbr.rel (0) target = $region13
    $region12: #{run.1} parent=1 // pred_region
      %s29 = ssub.s32 2048, 2048
      %30 = vsyncadd [#allocation5], %s29
      %s31 = sshll.u32 [#allocation4], 4
      %s32 = int_to_ptr.vmem [resolvable:$true] %s31
      %37 = dma.hbm_to_vmem [thread:$0]  %s2, 2048, %s32, [#allocation5], 128, 128, 8
    $region13: #{run.1} parent=1 // pred_fallthru
      _
    // Predicated region
    $region14: #{run.1} parent=1 // pred_check
      _
    $region15: #{run.1} parent=1 // pred_check_branch
      %39 = sbr.rel (0) target = $region17
    $region16: #{run.1} parent=1 // pred_region
      %s41 = ssub.s32 2048, 2048
      %42 = vsyncadd [#allocation5], %s41
      %s43 = sshll.u32 [#allocation6], 4
      %s44 = int_to_ptr.vmem [resolvable:$true] %s43
      %49 = dma.hbm_to_vmem [thread:$0]  %s3, 2048, %s44, [#allocation5], 128, 128, 8
    $region17: #{run.1} parent=1 // pred_fallthru
      _
    // Predicated region
    $region18: #{run.1} parent=1 // pred_check
      _
    $region19: #{run.1} parent=1 // pred_check_branch
      %51 = sbr.rel (0) target = $region21
    $region20: #{run.1} parent=1 // pred_region
      _
    $region21: #{run.1} parent=1 // pred_fallthru
      _
    // Predicated region
    $region22: #{run.1} parent=1 // pred_check
      _
    $region23: #{run.1} parent=1 // pred_check_branch
      %53 = sbr.rel (0) target = $region25
    $region24: #{run.1} parent=1 // pred_region
      %54 = dma.done [#allocation3], 4096
    $region25: #{run.1} parent=1 // pred_fallthru
      _
    // Predicated region
    $region26: #{run.1} parent=1 // pred_check
      _
    $region27: #{run.1} parent=1 // pred_check_branch
      %56 = sbr.rel (0) target = $region29
    $region28: #{run.1} parent=1 // pred_region
      %57 = dma.done [#allocation5], 2048
    $region29: #{run.1} parent=1 // pred_fallthru
      _
    // Predicated region
    $region30: #{run.1} parent=1 // pred_check
      _
    $region31: #{run.1} parent=1 // pred_check_branch
      %59 = sbr.rel (0) target = $region33
    $region32: #{run.1} parent=1 // pred_region
      %60 = dma.done [#allocation5], 2048
    $region33: #{run.1} parent=1 // pred_fallthru
      _
    %v61 = vld [vmem:[%s4] sm:$0x1]
    %v62 = vld [vmem:[%s4 + $0x1] sm:$0x1]
    %v63 = vld [vmem:[%s4 + $0x2] sm:$0x1]
    %v64 = vld [vmem:[%s0] sm:$0xff]
    %v65 = vld [vmem:[%s0 + $0x8] sm:$0xff]
    %v66 = vld [vmem:[#allocation2] sm:$0xff]
    %v67 = vld [vmem:[#allocation2 + $0x8] sm:$0xff]
    %v68 = vld [vmem:[#allocation2 + $0x10] sm:$0xff]
    %v69 = vld [vmem:[#allocation2 + $0x18] sm:$0xff]
    %v70 = vld [vmem:[#allocation2 + $0x20] sm:$0xff]
    %v71 = vld [vmem:[#allocation2 + $0x28] sm:$0xff]
    %v72 = vld [vmem:[#allocation2 + $0x30] sm:$0xff]
    %v73 = vld [vmem:[#allocation2 + $0x38] sm:$0xff]
    %v74 = vld [vmem:[#allocation2 + $0x40] sm:$0xff]
    %v75 = vld [vmem:[#allocation2 + $0x48] sm:$0xff]
    %v76 = vld [vmem:[#allocation2 + $0x50] sm:$0xff]
    %v77 = vld [vmem:[#allocation2 + $0x58] sm:$0xff]
    %v78 = vld [vmem:[#allocation2 + $0x60] sm:$0xff]
    %v79 = vld [vmem:[#allocation2 + $0x68] sm:$0xff]
    %v80 = vld [vmem:[#allocation2 + $0x70] sm:$0xff]
    %v81 = vld [vmem:[#allocation2 + $0x78] sm:$0xff]
    %v82 = vld [vmem:[#allocation2 + $0x80] sm:$0xff]
    %v83 = vld [vmem:[#allocation2 + $0x88] sm:$0xff]
    %v84 = vld [vmem:[#allocation2 + $0x90] sm:$0xff]
    %v85 = vld [vmem:[#allocation2 + $0x98] sm:$0xff]
    %v86 = vld [vmem:[#allocation2 + $0xa0] sm:$0xff]
    %v87 = vld [vmem:[#allocation2 + $0xa8] sm:$0xff]
    %v88 = vld [vmem:[#allocation2 + $0xb0] sm:$0xff]
    %v89 = vld [vmem:[#allocation2 + $0xb8] sm:$0xff]
    %v90 = vld [vmem:[#allocation2 + $0xc0] sm:$0xff]
    %v91 = vld [vmem:[#allocation2 + $0xc8] sm:$0xff]
    %v92 = vld [vmem:[#allocation2 + $0xd0] sm:$0xff]
    %v93 = vld [vmem:[#allocation2 + $0xd8] sm:$0xff]
    %v94 = vld [vmem:[#allocation2 + $0xe0] sm:$0xff]
    %v95 = vld [vmem:[#allocation2 + $0xe8] sm:$0xff]
    %v96 = vld [vmem:[#allocation2 + $0xf0] sm:$0xff]
    %v97 = vld [vmem:[#allocation2 + $0xf8] sm:$0xff]
    %v98 = vlaneseq
    %v99 = vshrl.u32 %v98, 7
    %v100 = vsub.s32 0, %v99
    %v101 = vrot.slane %v61, %v100
    %102 = vmatprep.subr.mxu0 0.0
    %103 = vmatpush1.msra.mxu0 %v66
    %104 = vmatprep.subr.mxu0 0.0
    %105 = vmatpush1.msra.mxu0 %v67
    %106 = vmatprep.subr.mxu0 0.0
    %107 = vmatpush1.msra.mxu0 %v68
    %108 = vmatprep.subr.mxu0 0.0
    %109 = vmatpush1.msra.mxu0 %v69
    %110 = vmatprep.subr.mxu0 0.0
    %111 = vmatpush1.msra.mxu0 %v70
    %112 = vmatprep.subr.mxu0 0.0
    %113 = vmatpush1.msra.mxu0 %v71
    %114 = vmatprep.subr.mxu0 0.0
    %115 = vmatpush1.msra.mxu0 %v72
    %116 = vmatprep.subr.mxu0 0.0
    %117 = vmatpush1.msra.mxu0 %v73
    %118 = vmatprep.subr.mxu0 0.0
    %119 = vmatpush1.msra.mxu0 %v74
    %120 = vmatprep.subr.mxu0 0.0
    %121 = vmatpush1.msra.mxu0 %v75
    %122 = vmatprep.subr.mxu0 0.0
    %123 = vmatpush1.msra.mxu0 %v76
    %124 = vmatprep.subr.mxu0 0.0
    %125 = vmatpush1.msra.mxu0 %v77
    %126 = vmatprep.subr.mxu0 0.0
    %127 = vmatpush1.msra.mxu0 %v78
    %128 = vmatprep.subr.mxu0 0.0
    %129 = vmatpush1.msra.mxu0 %v79
    %130 = vmatprep.subr.mxu0 0.0
    %131 = vmatpush1.msra.mxu0 %v80
    %132 = vmatprep.subr.mxu0 0.0
    %133 = vmatpush1.msra.mxu0 %v81
    %134 = vmatprep.subr.mxu0 0.0
    %135 = vmatpush1.msra.mxu0 %v82
    %136 = vmatprep.subr.mxu0 0.0
    %137 = vmatpush1.msra.mxu0 %v83
    %138 = vmatprep.subr.mxu0 0.0
    %139 = vmatpush1.msra.mxu0 %v84
    %140 = vmatprep.subr.mxu0 0.0
    %141 = vmatpush1.msra.mxu0 %v85
    %142 = vmatprep.subr.mxu0 0.0
    %143 = vmatpush1.msra.mxu0 %v86
    %144 = vmatprep.subr.mxu0 0.0
    %145 = vmatpush1.msra.mxu0 %v87
    %146 = vmatprep.subr.mxu0 0.0
    %147 = vmatpush1.msra.mxu0 %v88
    %148 = vmatprep.subr.mxu0 0.0
    %149 = vmatpush1.msra.mxu0 %v89
    %150 = vmatprep.subr.mxu0 0.0
    %151 = vmatpush1.msra.mxu0 %v90
    %152 = vmatprep.subr.mxu0 0.0
    %153 = vmatpush1.msra.mxu0 %v91
    %154 = vmatprep.subr.mxu0 0.0
    %155 = vmatpush1.msra.mxu0 %v92
    %156 = vmatprep.subr.mxu0 0.0
    %157 = vmatpush1.msra.mxu0 %v93
    %158 = vmatprep.subr.mxu0 0.0
    %159 = vmatpush1.msra.mxu0 %v94
    %160 = vmatprep.subr.mxu0 0.0
    %161 = vmatpush1.msra.mxu0 %v95
    %162 = vmatprep.subr.mxu0 0.0
    %163 = vmatpush1.msra.mxu0 %v96
    %164 = vmatprep.subr.mxu0 0.0
    %165 = vmatpush1.msra.mxu0 %v97
    %166 = vmatprep.mubr.f32.mxu0 %v65
    %167 = vmatmul.mubr.f32.gmra.mrb[0].mxu0 %v64
    %v168 = vpop.f32.mrb[0].mxu0
    %v169 = vadd.f32 %v101, %v168
    %v170 = vpop.f32.mrb[0].mxu0
    %171 = vdwg.mxu0
    %v172 = vtanh.pop %v169
    %v173 = vld [vmem:[#allocation4] sm:$0xff]
    %v174 = vld [vmem:[#allocation4 + $0x8] sm:$0xff]
    %v175 = vld [vmem:[#allocation4 + $0x10] sm:$0xff]
    %v176 = vld [vmem:[#allocation4 + $0x18] sm:$0xff]
    %v177 = vld [vmem:[#allocation4 + $0x20] sm:$0xff]
    %v178 = vld [vmem:[#allocation4 + $0x28] sm:$0xff]
    %v179 = vld [vmem:[#allocation4 + $0x30] sm:$0xff]
    %v180 = vld [vmem:[#allocation4 + $0x38] sm:$0xff]
    %v181 = vld [vmem:[#allocation4 + $0x40] sm:$0xff]
    %v182 = vld [vmem:[#allocation4 + $0x48] sm:$0xff]
    %v183 = vld [vmem:[#allocation4 + $0x50] sm:$0xff]
    %v184 = vld [vmem:[#allocation4 + $0x58] sm:$0xff]
    %v185 = vld [vmem:[#allocation4 + $0x60] sm:$0xff]
    %v186 = vld [vmem:[#allocation4 + $0x68] sm:$0xff]
    %v187 = vld [vmem:[#allocation4 + $0x70] sm:$0xff]
    %v188 = vld [vmem:[#allocation4 + $0x78] sm:$0xff]
    %v189 = vlaneseq
    %v190 = vshrl.u32 %v189, 7
    %v191 = vsub.s32 0, %v190
    %v192 = vrot.slane %v62, %v191
    %193 = vmatprep.subr.mxu0 0.0
    %194 = vmatpush1.msra.mxu0 %v173
    %195 = vmatprep.subr.mxu0 0.0
    %196 = vmatpush1.msra.mxu0 %v174
    %197 = vmatprep.subr.mxu0 0.0
    %198 = vmatpush1.msra.mxu0 %v175
    %199 = vmatprep.subr.mxu0 0.0
    %200 = vmatpush1.msra.mxu0 %v176
    %201 = vmatprep.subr.mxu0 0.0
    %202 = vmatpush1.msra.mxu0 %v177
    %203 = vmatprep.subr.mxu0 0.0
    %204 = vmatpush1.msra.mxu0 %v178
    %205 = vmatprep.subr.mxu0 0.0
    %206 = vmatpush1.msra.mxu0 %v179
    %207 = vmatprep.subr.mxu0 0.0
    %208 = vmatpush1.msra.mxu0 %v180
    %209 = vmatprep.subr.mxu0 0.0
    %210 = vmatpush1.msra.mxu0 %v181
    %211 = vmatprep.subr.mxu0 0.0
    %212 = vmatpush1.msra.mxu0 %v182
    %213 = vmatprep.subr.mxu0 0.0
    %214 = vmatpush1.msra.mxu0 %v183
    %215 = vmatprep.subr.mxu0 0.0
    %216 = vmatpush1.msra.mxu0 %v184
    %217 = vmatprep.subr.mxu0 0.0
    %218 = vmatpush1.msra.mxu0 %v185
    %219 = vmatprep.subr.mxu0 0.0
    %220 = vmatpush1.msra.mxu0 %v186
    %221 = vmatprep.subr.mxu0 0.0
    %222 = vmatpush1.msra.mxu0 %v187
    %223 = vmatprep.subr.mxu0 0.0
    %224 = vmatpush1.msra.mxu0 %v188
    %225 = vmatprep.subr.mxu0 0.0
    %226 = vmatpush1.msra.mxu0 0.0
    %227 = vmatprep.subr.mxu0 0.0
    %228 = vmatpush1.msra.mxu0 0.0
    %229 = vmatprep.subr.mxu0 0.0
    %230 = vmatpush1.msra.mxu0 0.0
    %231 = vmatprep.subr.mxu0 0.0
    %232 = vmatpush1.msra.mxu0 0.0
    %233 = vmatprep.subr.mxu0 0.0
    %234 = vmatpush1.msra.mxu0 0.0
    %235 = vmatprep.subr.mxu0 0.0
    %236 = vmatpush1.msra.mxu0 0.0
    %237 = vmatprep.subr.mxu0 0.0
    %238 = vmatpush1.msra.mxu0 0.0
    %239 = vmatprep.subr.mxu0 0.0
    %240 = vmatpush1.msra.mxu0 0.0
    %241 = vmatprep.subr.mxu0 0.0
    %242 = vmatpush1.msra.mxu0 0.0
    %243 = vmatprep.subr.mxu0 0.0
    %244 = vmatpush1.msra.mxu0 0.0
    %245 = vmatprep.subr.mxu0 0.0
    %246 = vmatpush1.msra.mxu0 0.0
    %247 = vmatprep.subr.mxu0 0.0
    %248 = vmatpush1.msra.mxu0 0.0
    %249 = vmatprep.subr.mxu0 0.0
    %250 = vmatpush1.msra.mxu0 0.0
    %251 = vmatprep.subr.mxu0 0.0
    %252 = vmatpush1.msra.mxu0 0.0
    %253 = vmatprep.subr.mxu0 0.0
    %254 = vmatpush1.msra.mxu0 0.0
    %255 = vmatprep.subr.mxu0 0.0
    %256 = vmatpush1.msra.mxu0 0.0
    %257 = vmatprep.mubr.f32.mxu0 0.0
    %258 = vmatmul.mubr.f32.gmra.mrb[0].mxu0 %v172
    %v259 = vpop.f32.mrb[0].mxu0
    %v260 = vadd.f32 %v192, %v259
    %v261 = vpop.f32.mrb[0].mxu0
    %262 = vdwg.mxu0
    %v263 = vmax.f32 %v260, 0.0
    %v264 = vld [vmem:[#allocation6] sm:$0xff]
    %v265 = vld [vmem:[#allocation6 + $0x8] sm:$0xff]
    %v266 = vld [vmem:[#allocation6 + $0x10] sm:$0xff]
    %v267 = vld [vmem:[#allocation6 + $0x18] sm:$0xff]
    %v268 = vld [vmem:[#allocation6 + $0x20] sm:$0xff]
    %v269 = vld [vmem:[#allocation6 + $0x28] sm:$0xff]
    %v270 = vld [vmem:[#allocation6 + $0x30] sm:$0xff]
    %v271 = vld [vmem:[#allocation6 + $0x38] sm:$0xff]
    %v272 = vld [vmem:[#allocation6 + $0x40] sm:$0xff]
    %v273 = vld [vmem:[#allocation6 + $0x48] sm:$0xff]
    %v274 = vld [vmem:[#allocation6 + $0x50] sm:$0xff]
    %v275 = vld [vmem:[#allocation6 + $0x58] sm:$0xff]
    %v276 = vld [vmem:[#allocation6 + $0x60] sm:$0xff]
    %v277 = vld [vmem:[#allocation6 + $0x68] sm:$0xff]
    %v278 = vld [vmem:[#allocation6 + $0x70] sm:$0xff]
    %v279 = vld [vmem:[#allocation6 + $0x78] sm:$0xff]
    %v280 = vlaneseq
    %v281 = vshrl.u32 %v280, 7
    %v282 = vsub.s32 0, %v281
    %v283 = vrot.slane %v63, %v282
    %284 = vmatprep.subr.mxu0 0.0
    %285 = vmatpush1.msra.mxu0 %v264
    %286 = vmatprep.subr.mxu0 0.0
    %287 = vmatpush1.msra.mxu0 %v265
    %288 = vmatprep.subr.mxu0 0.0
    %289 = vmatpush1.msra.mxu0 %v266
    %290 = vmatprep.subr.mxu0 0.0
    %291 = vmatpush1.msra.mxu0 %v267
    %292 = vmatprep.subr.mxu0 0.0
    %293 = vmatpush1.msra.mxu0 %v268
    %294 = vmatprep.subr.mxu0 0.0
    %295 = vmatpush1.msra.mxu0 %v269
    %296 = vmatprep.subr.mxu0 0.0
    %297 = vmatpush1.msra.mxu0 %v270
    %298 = vmatprep.subr.mxu0 0.0
    %299 = vmatpush1.msra.mxu0 %v271
    %300 = vmatprep.subr.mxu0 0.0
    %301 = vmatpush1.msra.mxu0 %v272
    %302 = vmatprep.subr.mxu0 0.0
    %303 = vmatpush1.msra.mxu0 %v273
    %304 = vmatprep.subr.mxu0 0.0
    %305 = vmatpush1.msra.mxu0 %v274
    %306 = vmatprep.subr.mxu0 0.0
    %307 = vmatpush1.msra.mxu0 %v275
    %308 = vmatprep.subr.mxu0 0.0
    %309 = vmatpush1.msra.mxu0 %v276
    %310 = vmatprep.subr.mxu0 0.0
    %311 = vmatpush1.msra.mxu0 %v277
    %312 = vmatprep.subr.mxu0 0.0
    %313 = vmatpush1.msra.mxu0 %v278
    %314 = vmatprep.subr.mxu0 0.0
    %315 = vmatpush1.msra.mxu0 %v279
    %316 = vmatprep.subr.mxu0 0.0
    %317 = vmatpush1.msra.mxu0 0.0
    %318 = vmatprep.subr.mxu0 0.0
    %319 = vmatpush1.msra.mxu0 0.0
    %320 = vmatprep.subr.mxu0 0.0
    %321 = vmatpush1.msra.mxu0 0.0
    %322 = vmatprep.subr.mxu0 0.0
    %323 = vmatpush1.msra.mxu0 0.0
    %324 = vmatprep.subr.mxu0 0.0
    %325 = vmatpush1.msra.mxu0 0.0
    %326 = vmatprep.subr.mxu0 0.0
    %327 = vmatpush1.msra.mxu0 0.0
    %328 = vmatprep.subr.mxu0 0.0
    %329 = vmatpush1.msra.mxu0 0.0
    %330 = vmatprep.subr.mxu0 0.0
    %331 = vmatpush1.msra.mxu0 0.0
    %332 = vmatprep.subr.mxu0 0.0
    %333 = vmatpush1.msra.mxu0 0.0
    %334 = vmatprep.subr.mxu0 0.0
    %335 = vmatpush1.msra.mxu0 0.0
    %336 = vmatprep.subr.mxu0 0.0
    %337 = vmatpush1.msra.mxu0 0.0
    %338 = vmatprep.subr.mxu0 0.0
    %339 = vmatpush1.msra.mxu0 0.0
    %340 = vmatprep.subr.mxu0 0.0
    %341 = vmatpush1.msra.mxu0 0.0
    %342 = vmatprep.subr.mxu0 0.0
    %343 = vmatpush1.msra.mxu0 0.0
    %344 = vmatprep.subr.mxu0 0.0
    %345 = vmatpush1.msra.mxu0 0.0
    %346 = vmatprep.subr.mxu0 0.0
    %347 = vmatpush1.msra.mxu0 0.0
    %348 = vmatprep.mubr.f32.mxu0 0.0
    %349 = vmatmul.mubr.f32.gmra.mrb[0].mxu0 %v263
    %v350 = vpop.f32.mrb[0].mxu0
    %v351 = vadd.f32 %v283, %v350
    %v352 = vpop.f32.mrb[0].mxu0
    %353 = vdwg.mxu0
    %354 = vst [vmem:[%s5] sm:$0xff] %v351
    // Predicated region
    $region34: #{run.1} parent=1 // pred_check
      _
    $region35: #{run.1} parent=1 // pred_check_branch
      %356 = sbr.rel (0) target = $region37
    $region36: #{run.1} parent=1 // pred_region
      _
    $region37: #{run.1} parent=1 // pred_fallthru
      _
    // Predicated region
    $region38: #{run.1} parent=1 // pred_check
      _
    $region39: #{run.1} parent=1 // pred_check_branch
      %358 = sbr.rel (0) target = $region41
    $region40: #{run.1} parent=1 // pred_region
      _
    $region41: #{run.1} parent=1 // pred_fallthru
      _
    %359 = vsyncpa [#allocation3], 1
    %360 = vsyncpa [#allocation5], 1

</llo_original>
